<compile_context>
chip_gen: v5e
topology: v5e:2x2
jax: 0.10.0
libtpu: 0.0.40
codegen_flags: <defaults>
</compile_context>

<pallas_src>
import functools
import math

import jax
import jax.numpy as jnp
from jax.experimental import pallas as pl
from jax.experimental.pallas import tpu as pltpu

# ----------------------------- problem sizes -------------------------------
BATCH = 2
SEQ = 5
EMB = 8
DK = 4

LANE = 128                      # TPU lane width
S_P = 8                         # seq padded to sublane multiple (power of 2)

_HP = jax.lax.Precision.HIGHEST


# ------------------------------- kernel ------------------------------------
def _attn_kernel(e_ref, w_ref, out_ref, e_pad_ref, *, s_pad, seq_len):
    # e_ref:     (B, S, emb)      natural-shape embeddings
    # w_ref:     (emb, 2*LANE)    fused projection (see pack_weights)
    # out_ref:   (B*S_P, LANE)    lane-dense output slab
    # e_pad_ref: (B*S_P, emb)     VMEM scratch for zero-padded, flattened E
    batch = e_ref.shape[0]
    lane = out_ref.shape[-1]

    # In-kernel zero-padding of E (no separate XLA pad/reshape dispatch).
    e_pad_ref[...] = jnp.zeros_like(e_pad_ref)
    for b in range(batch):                                  # tiny static loop
        e_pad_ref[b * s_pad:b * s_pad + seq_len, :] = e_ref[b]
    e = e_pad_ref[...]                                      # (B*S_P, emb)

    w = w_ref[...]                                          # (emb, 2*LANE)

    # One fused projection for all batches (contraction dim = emb, padded by
    # Mosaic internally).
    comb = jnp.dot(e, w, preferred_element_type=jnp.float32,
                   precision=_HP)                           # (BS, 2*LANE)
    vq = comb[:, :lane]    # V at lanes [0:emb], Q/sqrt(d_k) at [emb:emb+d_k]
    k = comb[:, lane:]     # K at lanes [emb:emb+d_k], zeros elsewhere

    # All-pairs scores over the flattened (batch*seq_pad) axis.  K's zero
    # lanes kill vq's V columns, so this is exactly (Q/sqrt(d_k)) @ K^T.
    scores = jax.lax.dot_general(
        vq, k, (((1,), (1,)), ((), ())),
        preferred_element_type=jnp.float32,
        precision=_HP)                                      # (BS, BS)

    # Block-diagonal batch mask + key-padding mask (equivalent to per-batch
    # attention).  s_pad is a power of two -> shifts / bitwise-and.
    log2_s = int(math.log2(s_pad))
    row = jax.lax.broadcasted_iota(jnp.int32, scores.shape, 0)
    col = jax.lax.broadcasted_iota(jnp.int32, scores.shape, 1)
    same_batch = (jax.lax.shift_right_logical(row, log2_s) ==
                  jax.lax.shift_right_logical(col, log2_s))
    valid_key = jnp.bitwise_and(col, s_pad - 1) < seq_len
    neg = jnp.finfo(jnp.float32).min
    scores = jnp.where(same_batch & valid_key, scores, neg)

    # softmax over keys (exact reciprocal: kernel is overhead-bound, not EUP)
    scores = scores - jnp.max(scores, axis=-1, keepdims=True)
    p = jnp.exp(scores)
    p = p * pl.reciprocal(jnp.sum(p, axis=-1, keepdims=True), approx=False)

    # p @ [V | Q/sqrt(d_k) | 0 ...]: attention output lands at lanes [0:emb];
    # lanes [emb:emb+d_k] hold p@Q (garbage for the caller) -> wrapper MUST
    # slice lanes [0:emb] only.
    out = jnp.dot(p, vq, preferred_element_type=jnp.float32,
                  precision=_HP)                            # (BS, LANE)
    out_ref[...] = out.astype(out_ref.dtype)


# --------------------------- weight preparation ------------------------------
def pack_weights(wq, wk, wv):
    """Build the fused projection ONCE (parameter-like, out of the hot path).

    wq: (d_k, emb), wk: (d_k, emb), wv: (emb, emb)  -- nn.Linear weights.
    Returns (emb, 2*LANE) float32 with 1/sqrt(d_k) folded into the Q columns.
    """
    d_k, emb = wq.shape
    assert emb + d_k <= LANE
    scale = 1.0 / math.sqrt(d_k)
    w = jnp.zeros((emb, 2 * LANE), jnp.float32)
    w = w.at[:, 0:emb].set(wv.T)                            # V  -> group 0 [0:emb]
    w = w.at[:, emb:emb + d_k].set(wq.T * scale)            # Q* -> group 0 [emb:emb+d_k]
    w = w.at[:, LANE + emb:LANE + emb + d_k].set(wk.T)      # K  -> group 1 [emb:emb+d_k]
    return w


# ------------------------------ wrapper -------------------------------------
@jax.jit
def self_att_head(E, w_packed):
    """E: (B, S, emb) float32;  w_packed: (emb, 2*LANE) from pack_weights."""
    # TODO(synk): the module's optional `mask` argument (always None in the
    # reference) is not implemented.
    B, S, emb = E.shape
    assert S <= S_P and (S_P & (S_P - 1)) == 0              # S_P power of two
    assert w_packed.shape == (emb, 2 * LANE)

    kernel = functools.partial(_attn_kernel, s_pad=S_P, seq_len=S)

    out_p = pl.pallas_call(
        kernel,
        out_shape=jax.ShapeDtypeStruct((B * S_P, LANE), jnp.float32),
        in_specs=[
            pl.BlockSpec(memory_space=pltpu.MemorySpace.VMEM),   # E, whole array
            pl.BlockSpec(memory_space=pltpu.MemorySpace.VMEM),   # w_packed
        ],
        out_specs=pl.BlockSpec(memory_space=pltpu.MemorySpace.VMEM),
        scratch_shapes=[pltpu.VMEM((B * S_P, emb), jnp.float32)],
    )(E, w_packed)

    # Attention output lives at the leading lanes [0:emb]; rows S..S_P-1 and
    # lanes >= emb are padding/garbage by construction.
    out = out_p.reshape(B, S_P, LANE)[:, :S, :emb]
    return out


# ------------------------- pure-JAX reference --------------------------------
def _reference(E, wq, wk, wv, d_k):
    Q = jnp.einsum("bse,de->bsd", E, wq, precision=_HP)
    K = jnp.einsum("bse,de->bsd", E, wk, precision=_HP)
    V = jnp.einsum("bse,ve->bsv", E, wv, precision=_HP)
    scores = jnp.einsum("bqd,bkd->bqk", Q, K, precision=_HP) / math.sqrt(d_k)
    p = jax.nn.softmax(scores, axis=-1)
    return jnp.einsum("bqk,bkv->bqv", p, V, precision=_HP)


# --------------------------------- main --------------------------------------
if __name__ == "__main__":
    key = jax.random.PRNGKey(0)
    k_e, k_q, k_k, k_v = jax.random.split(key, 4)

    # E ~ randn(batch, seq, emb)
    E = jax.random.normal(k_e, (BATCH, SEQ, EMB), dtype=jnp.float32)

    # nn.Linear(bias=False) weights, kaiming_uniform_(a=sqrt(5)):
    # bound = 1/sqrt(fan_in) with fan_in = emb_dim
    bound = 1.0 / math.sqrt(EMB)
    WQ = jax.random.uniform(k_q, (DK, EMB), jnp.float32, -bound, bound)
    WK = jax.random.uniform(k_k, (DK, EMB), jnp.float32, -bound, bound)
    WV = jax.random.uniform(k_v, (EMB, EMB), jnp.float32, -bound, bound)

    # fused/scaled weight built once, outside the per-call path
    w_packed = jax.block_until_ready(pack_weights(WQ, WK, WV))

    out = self_att_head(E, w_packed)
    out = jax.block_until_ready(out)

    ref = _reference(E, WQ, WK, WV, DK)
    assert out.shape == (BATCH, SEQ, EMB)
    # exact reciprocal + HIGHEST-precision matmuls on both sides; tolerance
    # tightened vs the previous 2e-3 (observed error is f32-level).
    assert jnp.allclose(out, ref, atol=1e-3, rtol=1e-3), "mismatch vs reference"

    print("KERNEL_OK")
</pallas_src>

<mosaic_0001>
module attributes {stable_mosaic.version = 11 : i64} {
  func.func @_attn_kernel(%arg0: memref<2x5x8xf32, #tpu.memory_space<vmem>>, %arg1: memref<8x256xf32, #tpu.memory_space<vmem>>, %arg2: memref<16x128xf32, #tpu.memory_space<vmem>>, %arg3: memref<16x8xf32, #tpu.memory_space<vmem>>) attributes {dimension_semantics = [], scalar_prefetch = 0 : i64, scratch_operands = 1 : i64, tpu.core_type = #tpu.core_type<tc>} {
    %cst = arith.constant 0.000000e+00 : f32
    %0 = vector.broadcast %cst : f32 to vector<16x8xf32>
    %c0 = arith.constant 0 : index
    %c0_0 = arith.constant 0 : index
    %1 = vector.load %arg3[%c0, %c0_0] : memref<16x8xf32, #tpu.memory_space<vmem>>, vector<16x8xf32>
    tpu.vector_store %arg3[%c0, %c0_0], %0 {strides = array<i32>} : memref<16x8xf32, #tpu.memory_space<vmem>>, vector<16x8xf32>,
    %c0_1 = arith.constant 0 : index
    %c0_2 = arith.constant 0 : index
    %c0_3 = arith.constant 0 : index
    %2 = vector.load %arg0[%c0_1, %c0_2, %c0_3] : memref<2x5x8xf32, #tpu.memory_space<vmem>>, vector<1x5x8xf32>
    %3 = vector.shape_cast %2 : vector<1x5x8xf32> to vector<5x8xf32>
    %c0_4 = arith.constant 0 : index
    %c0_5 = arith.constant 0 : index
    %4 = vector.load %arg3[%c0_4, %c0_5] : memref<16x8xf32, #tpu.memory_space<vmem>>, vector<5x8xf32>
    tpu.vector_store %arg3[%c0_4, %c0_5], %3 {strides = array<i32>} : memref<16x8xf32, #tpu.memory_space<vmem>>, vector<5x8xf32>,
    %c1 = arith.constant 1 : index
    %c0_6 = arith.constant 0 : index
    %c0_7 = arith.constant 0 : index
    %5 = vector.load %arg0[%c1, %c0_6, %c0_7] : memref<2x5x8xf32, #tpu.memory_space<vmem>>, vector<1x5x8xf32>
    %6 = vector.shape_cast %5 : vector<1x5x8xf32> to vector<5x8xf32>
    %c8 = arith.constant 8 : index
    %c0_8 = arith.constant 0 : index
    %7 = vector.load %arg3[%c8, %c0_8] : memref<16x8xf32, #tpu.memory_space<vmem>>, vector<5x8xf32>
    tpu.vector_store %arg3[%c8, %c0_8], %6 {strides = array<i32>} : memref<16x8xf32, #tpu.memory_space<vmem>>, vector<5x8xf32>,
    %c0_9 = arith.constant 0 : index
    %c0_10 = arith.constant 0 : index
    %8 = vector.load %arg3[%c0_9, %c0_10] : memref<16x8xf32, #tpu.memory_space<vmem>>, vector<16x8xf32>
    %c0_11 = arith.constant 0 : index
    %c0_12 = arith.constant 0 : index
    %9 = vector.load %arg1[%c0_11, %c0_12] : memref<8x256xf32, #tpu.memory_space<vmem>>, vector<8x256xf32>
    %cst_13 = arith.constant dense<0.000000e+00> : vector<16x256xf32>
    %10 = tpu.matmul %8, %9, %cst_13 {dimension_numbers = #tpu.dot_dimension_numbers<[1], [0], [0], [1], [0, 0, 1, 1], [], []>, precision = #tpu.contract_precision<fp32>} : vector<16x8xf32>, vector<8x256xf32>, vector<16x256xf32> -> vector<16x256xf32>
    %11 = vector.extract_strided_slice %10 {offsets = [0, 0], sizes = [16, 128], strides = [1, 1]} : vector<16x256xf32> to vector<16x128xf32>
    %12 = vector.extract_strided_slice %10 {offsets = [0, 128], sizes = [16, 128], strides = [1, 1]} : vector<16x256xf32> to vector<16x128xf32>
    %cst_14 = arith.constant dense<0.000000e+00> : vector<16x16xf32>
    %13 = tpu.matmul %11, %12, %cst_14 {dimension_numbers = #tpu.dot_dimension_numbers<[1], [1], [0], [0], [0, 0, 1, 0], [], []>, precision = #tpu.contract_precision<fp32>} : vector<16x128xf32>, vector<16x128xf32>, vector<16x16xf32> -> vector<16x16xf32>
    %14 = tpu.iota {dimensions = array<i32: 0>} : vector<16x16xi32>
    %15 = tpu.iota {dimensions = array<i32: 1>} : vector<16x16xi32>
    %c3_i32 = arith.constant 3 : i32
    %16 = vector.broadcast %c3_i32 : i32 to vector<16x16xi32>
    %17 = arith.shrui %14, %16 : vector<16x16xi32>
    %c3_i32_15 = arith.constant 3 : i32
    %18 = vector.broadcast %c3_i32_15 : i32 to vector<16x16xi32>
    %19 = arith.shrui %15, %18 : vector<16x16xi32>
    %20 = arith.cmpi eq, %17, %19 : vector<16x16xi32>
    %c7_i32 = arith.constant 7 : i32
    %21 = vector.broadcast %c7_i32 : i32 to vector<16x16xi32>
    %22 = arith.andi %15, %21 : vector<16x16xi32>
    %c5_i32 = arith.constant 5 : i32
    %23 = vector.broadcast %c5_i32 : i32 to vector<16x16xi32>
    %24 = arith.cmpi slt, %22, %23 : vector<16x16xi32>
    %25 = arith.andi %20, %24 : vector<16x16xi1>
    %cst_16 = arith.constant -3.40282347E+38 : f32
    %26 = vector.broadcast %cst_16 : f32 to vector<16x16xf32>
    %27 = arith.select %25, %13, %26 : vector<16x16xi1>, vector<16x16xf32>
    %cst_17 = arith.constant dense<0xFF800000> : vector<16xf32>
    %28 = vector.multi_reduction <maximumf>, %27, %cst_17 [1] : vector<16x16xf32> to vector<16xf32>
    %29 = vector.shape_cast %28 : vector<16xf32> to vector<16x1xf32>
    %30 = vector.broadcast %29 : vector<16x1xf32> to vector<16x16xf32>
    %31 = arith.subf %27, %30 : vector<16x16xf32>
    %32 = math.exp %31 : vector<16x16xf32>
    %cst_18 = arith.constant dense<0.000000e+00> : vector<16xf32>
    %33 = vector.multi_reduction <add>, %32, %cst_18 [1] : vector<16x16xf32> to vector<16xf32>
    %34 = vector.shape_cast %33 : vector<16xf32> to vector<16x1xf32>
    %35 = tpu.reciprocal %34 : vector<16x1xf32> -> vector<16x1xf32>
    %36 = vector.broadcast %35 : vector<16x1xf32> to vector<16x16xf32>
    %37 = arith.mulf %32, %36 : vector<16x16xf32>
    %cst_19 = arith.constant dense<0.000000e+00> : vector<16x128xf32>
    %38 = tpu.matmul %37, %11, %cst_19 {dimension_numbers = #tpu.dot_dimension_numbers<[1], [0], [0], [1], [0, 0, 1, 1], [], []>, precision = #tpu.contract_precision<fp32>} : vector<16x16xf32>, vector<16x128xf32>, vector<16x128xf32> -> vector<16x128xf32>
    %c0_20 = arith.constant 0 : index
    %c0_21 = arith.constant 0 : index
    %39 = vector.load %arg2[%c0_20, %c0_21] : memref<16x128xf32, #tpu.memory_space<vmem>>, vector<16x128xf32>
    tpu.vector_store %arg2[%c0_20, %c0_21], %38 {strides = array<i32>} : memref<16x128xf32, #tpu.memory_space<vmem>>, vector<16x128xf32>,
    return
  }
}

</mosaic_0001>

<llo_original>
// kernel: self_att_head.1
$region0: #{self_att_head.1}
  #allocation0 [shape = 'u32[]', space=smem, size = 0x4, offset = 0x4, fixed_abs, tag = 'smem constant byte address 0x4 - core index']
  #allocation1 [shape = 'u32[72,128]{1,0:T(1,128)}', space=vmem, size = 0x9000, scoped, tag = 'internal scratch']
  #allocation2 [shape = 'f32[16,8]{1,0:T(8,128)}', space=vmem, size = 0x2000, scoped, tag = 'scratch operand']
  %s0 = inlined_call_operand.vmem [shape: f32[2,5,8], index: 0, kind: input, shape index: {}]
  %s1 = inlined_call_operand.vmem [shape: f32[8,256], index: 1, kind: input, shape index: {}]
  %s2 = inlined_call_operand.vmem [shape: f32[16,128], index: 2, kind: output, shape index: {}]
  %s3 = sld [smem:[#allocation0]]
  $region18: #{self_att_head.1} parent=0
    _
  %s5 = ssub.s32 1, %s3
  %s6 = scalar_select 0, %s5, %s3
  // Predicated region
  $region2: #{self_att_head.1} parent=0 // pred_check
    _
  $region3: #{self_att_head.1} parent=0 // pred_check_branch
    %8 = sbr.rel (0) target = $region5
  $region4: #{self_att_head.1} parent=0 // pred_region
    _
  $region5: #{self_att_head.1} parent=0 // pred_fallthru
    _
  // Predicated region
  $region6: #{self_att_head.1} parent=0 // pred_check
    _
  $region7: #{self_att_head.1} parent=0 // pred_check_branch
    %10 = sbr.rel (0) target = $region9
  $region8: #{self_att_head.1} parent=0 // pred_region
    _
  $region9: #{self_att_head.1} parent=0 // pred_fallthru
    _
  %vm11 = vcmask 64512
  %12 = vst.msk [vmem:[#allocation2] sm:$0xff] %vm11, 0.0
  %13 = vst.msk [vmem:[#allocation2 + $0x8] sm:$0xff] %vm11, 0.0
  %v14 = vld [vmem:[%s0] sm:$0x1f]
  %vm15 = vcmask 61440
  %16 = vst.msk [vmem:[#allocation2] sm:$0x1f] %vm15, %v14
  %s17 = scalar_lea.vmem %s0, 8
  %v18 = vld [vmem:[%s17] sm:$0x1f]
  %19 = vst.msk [vmem:[#allocation2 + $0x8] sm:$0x1f] %vm15, %v18
  %v20 = vld [vmem:[#allocation2] sm:$0xff]
  %v21 = vld [vmem:[#allocation2 + $0x8] sm:$0xff]
  %v22 = vld [vmem:[%s1] sm:$0xff]
  %v23 = vld [vmem:[%s1 + $0x8] sm:$0xff]
  %v25 = vsel %vm11, %v20, 0
  %v28 = vsel %vm11, %v21, 0
  %30 = vmatpush.msra.mxu0 0.0
  %31 = vmatpush.msra.mxu0 0.0
  %32 = vmatpush.msra.mxu0 0.0
  %33 = vmatpush.msra.mxu0 0.0
  %34 = vmatpush.msra.mxu0 0.0
  %35 = vmatpush.msra.mxu0 0.0
  %36 = vmatpush.msra.mxu0 0.0
  %37 = vmatpush.msra.mxu0 0.0
  %38 = vmatpush.msra.mxu0 0.0
  %39 = vmatpush.msra.mxu0 0.0
  %40 = vmatpush.msra.mxu0 0.0
  %41 = vmatpush.msra.mxu0 0.0
  %42 = vmatpush.msra.mxu0 0.0
  %43 = vmatpush.msra.mxu0 0.0
  %44 = vmatpush.msra.mxu0 0.0
  %v45 = vand.u32 %v22, 4294901760
  %46 = vmatpush.msra.mxu0 %v45
  %v47 = vand.u32 %v25, 4294901760
  %v48 = vsub.f32 %v25, %v47
  %v49 = vand.u32 %v48, 4294901760
  %v50 = vsub.f32 %v48, %v49
  %v51 = vand.u32 %v50, 4294901760
  %52 = vmatmul.f32.gmra.mxu0 %v51
  %v53 = vpop.f32.mrf.mxu0
  %v54 = vadd.f32 0.0, %v53
  %v55 = vand.u32 %v28, 4294901760
  %v56 = vsub.f32 %v28, %v55
  %v57 = vand.u32 %v56, 4294901760
  %v58 = vsub.f32 %v56, %v57
  %v59 = vand.u32 %v58, 4294901760
  %60 = vmatmul.f32.gmra.mxu0 %v59
  %v61 = vpop.f32.mrf.mxu0
  %v62 = vadd.f32 0.0, %v61
  %63 = vdwg.mxu0
  %64 = vmatpush.msra.mxu0 0.0
  %65 = vmatpush.msra.mxu0 0.0
  %66 = vmatpush.msra.mxu0 0.0
  %67 = vmatpush.msra.mxu0 0.0
  %68 = vmatpush.msra.mxu0 0.0
  %69 = vmatpush.msra.mxu0 0.0
  %70 = vmatpush.msra.mxu0 0.0
  %71 = vmatpush.msra.mxu0 0.0
  %72 = vmatpush.msra.mxu0 0.0
  %73 = vmatpush.msra.mxu0 0.0
  %74 = vmatpush.msra.mxu0 0.0
  %75 = vmatpush.msra.mxu0 0.0
  %76 = vmatpush.msra.mxu0 0.0
  %77 = vmatpush.msra.mxu0 0.0
  %78 = vmatpush.msra.mxu0 0.0
  %v79 = vand.u32 %v22, 4294901760
  %v80 = vsub.f32 %v22, %v79
  %v81 = vand.u32 %v80, 4294901760
  %v82 = vsub.f32 %v80, %v81
  %v83 = vand.u32 %v82, 4294901760
  %84 = vmatpush.msra.mxu0 %v83
  %v85 = vand.u32 %v25, 4294901760
  %86 = vmatmul.f32.gmra.mxu0 %v85
  %v87 = vpop.f32.mrf.mxu0
  %v88 = vadd.f32 %v54, %v87
  %v89 = vand.u32 %v28, 4294901760
  %90 = vmatmul.f32.gmra.mxu0 %v89
  %v91 = vpop.f32.mrf.mxu0
  %v92 = vadd.f32 %v62, %v91
  %93 = vdwg.mxu0
  %94 = vmatpush.msra.mxu0 0.0
  %95 = vmatpush.msra.mxu0 0.0
  %96 = vmatpush.msra.mxu0 0.0
  %97 = vmatpush.msra.mxu0 0.0
  %98 = vmatpush.msra.mxu0 0.0
  %99 = vmatpush.msra.mxu0 0.0
  %100 = vmatpush.msra.mxu0 0.0
  %101 = vmatpush.msra.mxu0 0.0
  %102 = vmatpush.msra.mxu0 0.0
  %103 = vmatpush.msra.mxu0 0.0
  %104 = vmatpush.msra.mxu0 0.0
  %105 = vmatpush.msra.mxu0 0.0
  %106 = vmatpush.msra.mxu0 0.0
  %107 = vmatpush.msra.mxu0 0.0
  %108 = vmatpush.msra.mxu0 0.0
  %v109 = vand.u32 %v22, 4294901760
  %v110 = vsub.f32 %v22, %v109
  %111 = vmatpush.msra.mxu0 %v110
  %v112 = vand.u32 %v25, 4294901760
  %v113 = vsub.f32 %v25, %v112
  %114 = vmatmul.f32.gmra.mxu0 %v113
  %v115 = vpop.f32.mrf.mxu0
  %v116 = vadd.f32 %v88, %v115
  %v117 = vand.u32 %v28, 4294901760
  %v118 = vsub.f32 %v28, %v117
  %119 = vmatmul.f32.gmra.mxu0 %v118
  %v120 = vpop.f32.mrf.mxu0
  %v121 = vadd.f32 %v92, %v120
  %122 = vdwg.mxu0
  %123 = vmatpush.msra.mxu0 0.0
  %124 = vmatpush.msra.mxu0 0.0
  %125 = vmatpush.msra.mxu0 0.0
  %126 = vmatpush.msra.mxu0 0.0
  %127 = vmatpush.msra.mxu0 0.0
  %128 = vmatpush.msra.mxu0 0.0
  %129 = vmatpush.msra.mxu0 0.0
  %130 = vmatpush.msra.mxu0 0.0
  %131 = vmatpush.msra.mxu0 0.0
  %132 = vmatpush.msra.mxu0 0.0
  %133 = vmatpush.msra.mxu0 0.0
  %134 = vmatpush.msra.mxu0 0.0
  %135 = vmatpush.msra.mxu0 0.0
  %136 = vmatpush.msra.mxu0 0.0
  %137 = vmatpush.msra.mxu0 0.0
  %v138 = vand.u32 %v22, 4294901760
  %139 = vmatpush.msra.mxu0 %v138
  %v140 = vand.u32 %v25, 4294901760
  %v141 = vsub.f32 %v25, %v140
  %v142 = vand.u32 %v141, 4294901760
  %143 = vmatmul.f32.gmra.mxu0 %v142
  %v144 = vpop.f32.mrf.mxu0
  %v145 = vadd.f32 %v116, %v144
  %v146 = vand.u32 %v28, 4294901760
  %v147 = vsub.f32 %v28, %v146
  %v148 = vand.u32 %v147, 4294901760
  %149 = vmatmul.f32.gmra.mxu0 %v148
  %v150 = vpop.f32.mrf.mxu0
  %v151 = vadd.f32 %v121, %v150
  %152 = vdwg.mxu0
  %153 = vmatpush.msra.mxu0 0.0
  %154 = vmatpush.msra.mxu0 0.0
  %155 = vmatpush.msra.mxu0 0.0
  %156 = vmatpush.msra.mxu0 0.0
  %157 = vmatpush.msra.mxu0 0.0
  %158 = vmatpush.msra.mxu0 0.0
  %159 = vmatpush.msra.mxu0 0.0
  %160 = vmatpush.msra.mxu0 0.0
  %161 = vmatpush.msra.mxu0 0.0
  %162 = vmatpush.msra.mxu0 0.0
  %163 = vmatpush.msra.mxu0 0.0
  %164 = vmatpush.msra.mxu0 0.0
  %165 = vmatpush.msra.mxu0 0.0
  %166 = vmatpush.msra.mxu0 0.0
  %167 = vmatpush.msra.mxu0 0.0
  %v168 = vand.u32 %v22, 4294901760
  %v169 = vsub.f32 %v22, %v168
  %v170 = vand.u32 %v169, 4294901760
  %171 = vmatpush.msra.mxu0 %v170
  %v172 = vand.u32 %v25, 4294901760
  %173 = vmatmul.f32.gmra.mxu0 %v172
  %v174 = vpop.f32.mrf.mxu0
  %v175 = vadd.f32 %v145, %v174
  %v176 = vand.u32 %v28, 4294901760
  %177 = vmatmul.f32.gmra.mxu0 %v176
  %v178 = vpop.f32.mrf.mxu0
  %v179 = vadd.f32 %v151, %v178
  %180 = vdwg.mxu0
  %181 = vmatpush.msra.mxu0 0.0
  %182 = vmatpush.msra.mxu0 0.0
  %183 = vmatpush.msra.mxu0 0.0
  %184 = vmatpush.msra.mxu0 0.0
  %185 = vmatpush.msra.mxu0 0.0
  %186 = vmatpush.msra.mxu0 0.0
  %187 = vmatpush.msra.mxu0 0.0
  %188 = vmatpush.msra.mxu0 0.0
  %189 = vmatpush.msra.mxu0 0.0
  %190 = vmatpush.msra.mxu0 0.0
  %191 = vmatpush.msra.mxu0 0.0
  %192 = vmatpush.msra.mxu0 0.0
  %193 = vmatpush.msra.mxu0 0.0
  %194 = vmatpush.msra.mxu0 0.0
  %195 = vmatpush.msra.mxu0 0.0
  %v196 = vand.u32 %v22, 4294901760
  %197 = vmatpush.msra.mxu0 %v196
  %v198 = vand.u32 %v25, 4294901760
  %199 = vmatmul.f32.gmra.mxu0 %v198
  %v200 = vpop.f32.mrf.mxu0
  %v201 = vadd.f32 %v175, %v200
  %v202 = vand.u32 %v28, 4294901760
  %203 = vmatmul.f32.gmra.mxu0 %v202
  %v204 = vpop.f32.mrf.mxu0
  %v205 = vadd.f32 %v179, %v204
  %206 = vdwg.mxu0
  %207 = vmatpush.msra.mxu0 0.0
  %208 = vmatpush.msra.mxu0 0.0
  %209 = vmatpush.msra.mxu0 0.0
  %210 = vmatpush.msra.mxu0 0.0
  %211 = vmatpush.msra.mxu0 0.0
  %212 = vmatpush.msra.mxu0 0.0
  %213 = vmatpush.msra.mxu0 0.0
  %214 = vmatpush.msra.mxu0 0.0
  %215 = vmatpush.msra.mxu0 0.0
  %216 = vmatpush.msra.mxu0 0.0
  %217 = vmatpush.msra.mxu0 0.0
  %218 = vmatpush.msra.mxu0 0.0
  %219 = vmatpush.msra.mxu0 0.0
  %220 = vmatpush.msra.mxu0 0.0
  %221 = vmatpush.msra.mxu0 0.0
  %v222 = vand.u32 %v23, 4294901760
  %223 = vmatpush.msra.mxu0 %v222
  %v224 = vand.u32 %v25, 4294901760
  %v225 = vsub.f32 %v25, %v224
  %v226 = vand.u32 %v225, 4294901760
  %v227 = vsub.f32 %v225, %v226
  %v228 = vand.u32 %v227, 4294901760
  %229 = vmatmul.f32.gmra.mxu0 %v228
  %v230 = vpop.f32.mrf.mxu0
  %v231 = vadd.f32 0.0, %v230
  %v232 = vand.u32 %v28, 4294901760
  %v233 = vsub.f32 %v28, %v232
  %v234 = vand.u32 %v233, 4294901760
  %v235 = vsub.f32 %v233, %v234
  %v236 = vand.u32 %v235, 4294901760
  %237 = vmatmul.f32.gmra.mxu0 %v236
  %v238 = vpop.f32.mrf.mxu0
  %v239 = vadd.f32 0.0, %v238
  %240 = vdwg.mxu0
  %241 = vmatpush.msra.mxu0 0.0
  %242 = vmatpush.msra.mxu0 0.0
  %243 = vmatpush.msra.mxu0 0.0
  %244 = vmatpush.msra.mxu0 0.0
  %245 = vmatpush.msra.mxu0 0.0
  %246 = vmatpush.msra.mxu0 0.0
  %247 = vmatpush.msra.mxu0 0.0
  %248 = vmatpush.msra.mxu0 0.0
  %249 = vmatpush.msra.mxu0 0.0
  %250 = vmatpush.msra.mxu0 0.0
  %251 = vmatpush.msra.mxu0 0.0
  %252 = vmatpush.msra.mxu0 0.0
  %253 = vmatpush.msra.mxu0 0.0
  %254 = vmatpush.msra.mxu0 0.0
  %255 = vmatpush.msra.mxu0 0.0
  %v256 = vand.u32 %v23, 4294901760
  %v257 = vsub.f32 %v23, %v256
  %v258 = vand.u32 %v257, 4294901760
  %v259 = vsub.f32 %v257, %v258
  %v260 = vand.u32 %v259, 4294901760
  %261 = vmatpush.msra.mxu0 %v260
  %v262 = vand.u32 %v25, 4294901760
  %263 = vmatmul.f32.gmra.mxu0 %v262
  %v264 = vpop.f32.mrf.mxu0
  %v265 = vadd.f32 %v231, %v264
  %v266 = vand.u32 %v28, 4294901760
  %267 = vmatmul.f32.gmra.mxu0 %v266
  %v268 = vpop.f32.mrf.mxu0
  %v269 = vadd.f32 %v239, %v268
  %270 = vdwg.mxu0
  %271 = vmatpush.msra.mxu0 0.0
  %272 = vmatpush.msra.mxu0 0.0
  %273 = vmatpush.msra.mxu0 0.0
  %274 = vmatpush.msra.mxu0 0.0
  %275 = vmatpush.msra.mxu0 0.0
  %276 = vmatpush.msra.mxu0 0.0
  %277 = vmatpush.msra.mxu0 0.0
  %278 = vmatpush.msra.mxu0 0.0
  %279 = vmatpush.msra.mxu0 0.0
  %280 = vmatpush.msra.mxu0 0.0
  %281 = vmatpush.msra.mxu0 0.0
  %282 = vmatpush.msra.mxu0 0.0
  %283 = vmatpush.msra.mxu0 0.0
  %284 = vmatpush.msra.mxu0 0.0
  %285 = vmatpush.msra.mxu0 0.0
  %v286 = vand.u32 %v23, 4294901760
  %v287 = vsub.f32 %v23, %v286
  %288 = vmatpush.msra.mxu0 %v287
  %v289 = vand.u32 %v25, 4294901760
  %v290 = vsub.f32 %v25, %v289
  %291 = vmatmul.f32.gmra.mxu0 %v290
  %v292 = vpop.f32.mrf.mxu0
  %v293 = vadd.f32 %v265, %v292
  %v294 = vand.u32 %v28, 4294901760
  %v295 = vsub.f32 %v28, %v294
  %296 = vmatmul.f32.gmra.mxu0 %v295
  %v297 = vpop.f32.mrf.mxu0
  %v298 = vadd.f32 %v269, %v297
  %299 = vdwg.mxu0
  %300 = vmatpush.msra.mxu0 0.0
  %301 = vmatpush.msra.mxu0 0.0
  %302 = vmatpush.msra.mxu0 0.0
  %303 = vmatpush.msra.mxu0 0.0
  %304 = vmatpush.msra.mxu0 0.0
  %305 = vmatpush.msra.mxu0 0.0
  %306 = vmatpush.msra.mxu0 0.0
  %307 = vmatpush.msra.mxu0 0.0
  %308 = vmatpush.msra.mxu0 0.0
  %309 = vmatpush.msra.mxu0 0.0
  %310 = vmatpush.msra.mxu0 0.0
  %311 = vmatpush.msra.mxu0 0.0
  %312 = vmatpush.msra.mxu0 0.0
  %313 = vmatpush.msra.mxu0 0.0
  %314 = vmatpush.msra.mxu0 0.0
  %v315 = vand.u32 %v23, 4294901760
  %316 = vmatpush.msra.mxu0 %v315
  %v317 = vand.u32 %v25, 4294901760
  %v318 = vsub.f32 %v25, %v317
  %v319 = vand.u32 %v318, 4294901760
  %320 = vmatmul.f32.gmra.mxu0 %v319
  %v321 = vpop.f32.mrf.mxu0
  %v322 = vadd.f32 %v293, %v321
  %v323 = vand.u32 %v28, 4294901760
  %v324 = vsub.f32 %v28, %v323
  %v325 = vand.u32 %v324, 4294901760
  %326 = vmatmul.f32.gmra.mxu0 %v325
  %v327 = vpop.f32.mrf.mxu0
  %v328 = vadd.f32 %v298, %v327
  %329 = vdwg.mxu0
  %330 = vmatpush.msra.mxu0 0.0
  %331 = vmatpush.msra.mxu0 0.0
  %332 = vmatpush.msra.mxu0 0.0
  %333 = vmatpush.msra.mxu0 0.0
  %334 = vmatpush.msra.mxu0 0.0
  %335 = vmatpush.msra.mxu0 0.0
  %336 = vmatpush.msra.mxu0 0.0
  %337 = vmatpush.msra.mxu0 0.0
  %338 = vmatpush.msra.mxu0 0.0
  %339 = vmatpush.msra.mxu0 0.0
  %340 = vmatpush.msra.mxu0 0.0
  %341 = vmatpush.msra.mxu0 0.0
  %342 = vmatpush.msra.mxu0 0.0
  %343 = vmatpush.msra.mxu0 0.0
  %344 = vmatpush.msra.mxu0 0.0
  %v345 = vand.u32 %v23, 4294901760
  %v346 = vsub.f32 %v23, %v345
  %v347 = vand.u32 %v346, 4294901760
  %348 = vmatpush.msra.mxu0 %v347
  %v349 = vand.u32 %v25, 4294901760
  %350 = vmatmul.f32.gmra.mxu0 %v349
  %v351 = vpop.f32.mrf.mxu0
  %v352 = vadd.f32 %v322, %v351
  %v353 = vand.u32 %v28, 4294901760
  %354 = vmatmul.f32.gmra.mxu0 %v353
  %v355 = vpop.f32.mrf.mxu0
  %v356 = vadd.f32 %v328, %v355
  %357 = vdwg.mxu0
  %358 = vmatpush.msra.mxu0 0.0
  %359 = vmatpush.msra.mxu0 0.0
  %360 = vmatpush.msra.mxu0 0.0
  %361 = vmatpush.msra.mxu0 0.0
  %362 = vmatpush.msra.mxu0 0.0
  %363 = vmatpush.msra.mxu0 0.0
  %364 = vmatpush.msra.mxu0 0.0
  %365 = vmatpush.msra.mxu0 0.0
  %366 = vmatpush.msra.mxu0 0.0
  %367 = vmatpush.msra.mxu0 0.0
  %368 = vmatpush.msra.mxu0 0.0
  %369 = vmatpush.msra.mxu0 0.0
  %370 = vmatpush.msra.mxu0 0.0
  %371 = vmatpush.msra.mxu0 0.0
  %372 = vmatpush.msra.mxu0 0.0
  %v373 = vand.u32 %v23, 4294901760
  %374 = vmatpush.msra.mxu0 %v373
  %v375 = vand.u32 %v25, 4294901760
  %376 = vmatmul.f32.gmra.mxu0 %v375
  %v377 = vpop.f32.mrf.mxu0
  %v378 = vadd.f32 %v352, %v377
  %v379 = vand.u32 %v28, 4294901760
  %380 = vmatmul.f32.gmra.mxu0 %v379
  %v381 = vpop.f32.mrf.mxu0
  %v382 = vadd.f32 %v356, %v381
  %383 = vdwg.mxu0
  %384 = vmatpush.xpose.msra.mxu0 0.0
  %385 = vmatpush.xpose.msra.mxu0 0.0
  %386 = vmatpush.xpose.msra.mxu0 0.0
  %387 = vmatpush.xpose.msra.mxu0 0.0
  %388 = vmatpush.xpose.msra.mxu0 0.0
  %389 = vmatpush.xpose.msra.mxu0 0.0
  %390 = vmatpush.xpose.msra.mxu0 0.0
  %391 = vmatpush.xpose.msra.mxu0 0.0
  %392 = vmatpush.xpose.msra.mxu0 0.0
  %393 = vmatpush.xpose.msra.mxu0 0.0
  %394 = vmatpush.xpose.msra.mxu0 0.0
  %395 = vmatpush.xpose.msra.mxu0 0.0
  %396 = vmatpush.xpose.msra.mxu0 0.0
  %397 = vmatpush.xpose.msra.mxu0 0.0
  %v398 = vand.u32 %v382, 4294901760
  %399 = vmatpush.xpose.msra.mxu0 %v398
  %v400 = vand.u32 %v378, 4294901760
  %401 = vmatpush.xpose.msra.mxu0 %v400
  %v402 = vand.u32 %v201, 4294901760
  %v403 = vsub.f32 %v201, %v402
  %v404 = vand.u32 %v403, 4294901760
  %v405 = vsub.f32 %v403, %v404
  %v406 = vand.u32 %v405, 4294901760
  %407 = vmatmul.f32.gmra.mxu0 %v406
  %v408 = vpop.f32.mrf.mxu0
  %v409 = vadd.f32 0.0, %v408
  %v410 = vand.u32 %v205, 4294901760
  %v411 = vsub.f32 %v205, %v410
  %v412 = vand.u32 %v411, 4294901760
  %v413 = vsub.f32 %v411, %v412
  %v414 = vand.u32 %v413, 4294901760
  %415 = vmatmul.f32.gmra.mxu0 %v414
  %v416 = vpop.f32.mrf.mxu0
  %v417 = vadd.f32 0.0, %v416
  %418 = vdwg.mxu0
  %419 = vmatpush.xpose.msra.mxu0 0.0
  %420 = vmatpush.xpose.msra.mxu0 0.0
  %421 = vmatpush.xpose.msra.mxu0 0.0
  %422 = vmatpush.xpose.msra.mxu0 0.0
  %423 = vmatpush.xpose.msra.mxu0 0.0
  %424 = vmatpush.xpose.msra.mxu0 0.0
  %425 = vmatpush.xpose.msra.mxu0 0.0
  %426 = vmatpush.xpose.msra.mxu0 0.0
  %427 = vmatpush.xpose.msra.mxu0 0.0
  %428 = vmatpush.xpose.msra.mxu0 0.0
  %429 = vmatpush.xpose.msra.mxu0 0.0
  %430 = vmatpush.xpose.msra.mxu0 0.0
  %431 = vmatpush.xpose.msra.mxu0 0.0
  %432 = vmatpush.xpose.msra.mxu0 0.0
  %v433 = vand.u32 %v382, 4294901760
  %v434 = vsub.f32 %v382, %v433
  %v435 = vand.u32 %v434, 4294901760
  %v436 = vsub.f32 %v434, %v435
  %v437 = vand.u32 %v436, 4294901760
  %438 = vmatpush.xpose.msra.mxu0 %v437
  %v439 = vand.u32 %v378, 4294901760
  %v440 = vsub.f32 %v378, %v439
  %v441 = vand.u32 %v440, 4294901760
  %v442 = vsub.f32 %v440, %v441
  %v443 = vand.u32 %v442, 4294901760
  %444 = vmatpush.xpose.msra.mxu0 %v443
  %v445 = vand.u32 %v201, 4294901760
  %446 = vmatmul.f32.gmra.mxu0 %v445
  %v447 = vpop.f32.mrf.mxu0
  %v448 = vadd.f32 %v409, %v447
  %v449 = vand.u32 %v205, 4294901760
  %450 = vmatmul.f32.gmra.mxu0 %v449
  %v451 = vpop.f32.mrf.mxu0
  %v452 = vadd.f32 %v417, %v451
  %453 = vdwg.mxu0
  %454 = vmatpush.xpose.msra.mxu0 0.0
  %455 = vmatpush.xpose.msra.mxu0 0.0
  %456 = vmatpush.xpose.msra.mxu0 0.0
  %457 = vmatpush.xpose.msra.mxu0 0.0
  %458 = vmatpush.xpose.msra.mxu0 0.0
  %459 = vmatpush.xpose.msra.mxu0 0.0
  %460 = vmatpush.xpose.msra.mxu0 0.0
  %461 = vmatpush.xpose.msra.mxu0 0.0
  %462 = vmatpush.xpose.msra.mxu0 0.0
  %463 = vmatpush.xpose.msra.mxu0 0.0
  %464 = vmatpush.xpose.msra.mxu0 0.0
  %465 = vmatpush.xpose.msra.mxu0 0.0
  %466 = vmatpush.xpose.msra.mxu0 0.0
  %467 = vmatpush.xpose.msra.mxu0 0.0
  %v468 = vand.u32 %v382, 4294901760
  %v469 = vsub.f32 %v382, %v468
  %470 = vmatpush.xpose.msra.mxu0 %v469
  %v471 = vand.u32 %v378, 4294901760
  %v472 = vsub.f32 %v378, %v471
  %473 = vmatpush.xpose.msra.mxu0 %v472
  %v474 = vand.u32 %v201, 4294901760
  %v475 = vsub.f32 %v201, %v474
  %476 = vmatmul.f32.gmra.mxu0 %v475
  %v477 = vpop.f32.mrf.mxu0
  %v478 = vadd.f32 %v448, %v477
  %v479 = vand.u32 %v205, 4294901760
  %v480 = vsub.f32 %v205, %v479
  %481 = vmatmul.f32.gmra.mxu0 %v480
  %v482 = vpop.f32.mrf.mxu0
  %v483 = vadd.f32 %v452, %v482
  %484 = vdwg.mxu0
  %485 = vmatpush.xpose.msra.mxu0 0.0
  %486 = vmatpush.xpose.msra.mxu0 0.0
  %487 = vmatpush.xpose.msra.mxu0 0.0
  %488 = vmatpush.xpose.msra.mxu0 0.0
  %489 = vmatpush.xpose.msra.mxu0 0.0
  %490 = vmatpush.xpose.msra.mxu0 0.0
  %491 = vmatpush.xpose.msra.mxu0 0.0
  %492 = vmatpush.xpose.msra.mxu0 0.0
  %493 = vmatpush.xpose.msra.mxu0 0.0
  %494 = vmatpush.xpose.msra.mxu0 0.0
  %495 = vmatpush.xpose.msra.mxu0 0.0
  %496 = vmatpush.xpose.msra.mxu0 0.0
  %497 = vmatpush.xpose.msra.mxu0 0.0
  %498 = vmatpush.xpose.msra.mxu0 0.0
  %v499 = vand.u32 %v382, 4294901760
  %500 = vmatpush.xpose.msra.mxu0 %v499
  %v501 = vand.u32 %v378, 4294901760
  %502 = vmatpush.xpose.msra.mxu0 %v501
  %v503 = vand.u32 %v201, 4294901760
  %v504 = vsub.f32 %v201, %v503
  %v505 = vand.u32 %v504, 4294901760
  %506 = vmatmul.f32.gmra.mxu0 %v505
  %v507 = vpop.f32.mrf.mxu0
  %v508 = vadd.f32 %v478, %v507
  %v509 = vand.u32 %v205, 4294901760
  %v510 = vsub.f32 %v205, %v509
  %v511 = vand.u32 %v510, 4294901760
  %512 = vmatmul.f32.gmra.mxu0 %v511
  %v513 = vpop.f32.mrf.mxu0
  %v514 = vadd.f32 %v483, %v513
  %515 = vdwg.mxu0
  %516 = vmatpush.xpose.msra.mxu0 0.0
  %517 = vmatpush.xpose.msra.mxu0 0.0
  %518 = vmatpush.xpose.msra.mxu0 0.0
  %519 = vmatpush.xpose.msra.mxu0 0.0
  %520 = vmatpush.xpose.msra.mxu0 0.0
  %521 = vmatpush.xpose.msra.mxu0 0.0
  %522 = vmatpush.xpose.msra.mxu0 0.0
  %523 = vmatpush.xpose.msra.mxu0 0.0
  %524 = vmatpush.xpose.msra.mxu0 0.0
  %525 = vmatpush.xpose.msra.mxu0 0.0
  %526 = vmatpush.xpose.msra.mxu0 0.0
  %527 = vmatpush.xpose.msra.mxu0 0.0
  %528 = vmatpush.xpose.msra.mxu0 0.0
  %529 = vmatpush.xpose.msra.mxu0 0.0
  %v530 = vand.u32 %v382, 4294901760
  %v531 = vsub.f32 %v382, %v530
  %v532 = vand.u32 %v531, 4294901760
  %533 = vmatpush.xpose.msra.mxu0 %v532
  %v534 = vand.u32 %v378, 4294901760
  %v535 = vsub.f32 %v378, %v534
  %v536 = vand.u32 %v535, 4294901760
  %537 = vmatpush.xpose.msra.mxu0 %v536
  %v538 = vand.u32 %v201, 4294901760
  %539 = vmatmul.f32.gmra.mxu0 %v538
  %v540 = vpop.f32.mrf.mxu0
  %v541 = vadd.f32 %v508, %v540
  %v542 = vand.u32 %v205, 4294901760
  %543 = vmatmul.f32.gmra.mxu0 %v542
  %v544 = vpop.f32.mrf.mxu0
  %v545 = vadd.f32 %v514, %v544
  %546 = vdwg.mxu0
  %547 = vmatpush.xpose.msra.mxu0 0.0
  %548 = vmatpush.xpose.msra.mxu0 0.0
  %549 = vmatpush.xpose.msra.mxu0 0.0
  %550 = vmatpush.xpose.msra.mxu0 0.0
  %551 = vmatpush.xpose.msra.mxu0 0.0
  %552 = vmatpush.xpose.msra.mxu0 0.0
  %553 = vmatpush.xpose.msra.mxu0 0.0
  %554 = vmatpush.xpose.msra.mxu0 0.0
  %555 = vmatpush.xpose.msra.mxu0 0.0
  %556 = vmatpush.xpose.msra.mxu0 0.0
  %557 = vmatpush.xpose.msra.mxu0 0.0
  %558 = vmatpush.xpose.msra.mxu0 0.0
  %559 = vmatpush.xpose.msra.mxu0 0.0
  %560 = vmatpush.xpose.msra.mxu0 0.0
  %v561 = vand.u32 %v382, 4294901760
  %562 = vmatpush.xpose.msra.mxu0 %v561
  %v563 = vand.u32 %v378, 4294901760
  %564 = vmatpush.xpose.msra.mxu0 %v563
  %v565 = vand.u32 %v201, 4294901760
  %566 = vmatmul.f32.gmra.mxu0 %v565
  %v567 = vpop.f32.mrf.mxu0
  %v568 = vadd.f32 %v541, %v567
  %v569 = vand.u32 %v205, 4294901760
  %570 = vmatmul.f32.gmra.mxu0 %v569
  %v571 = vpop.f32.mrf.mxu0
  %v572 = vadd.f32 %v545, %v571
  %573 = vdwg.mxu0
  %v574 = vlaneseq
  %v575 = vshrl.u32 %v574, 7
  %v576 = vadd.s32 %v575, 8
  %v577 = vlaneseq
  %v578 = vand.u32 %v577, 127
  %v579 = vshrl.u32 %v575, 3
  %v580 = vshrl.u32 %v576, 3
  %v581 = vshrl.u32 %v578, 3
  %vm582 = vcmp.eq.s32.totalorder %v579, %v581
  %vm583 = vcmp.eq.s32.totalorder %v580, %v581
  %v584 = vand.u32 %v578, 7
  %vm585 = vcmp.lt.s32.totalorder %v584, 5
  %vm586 = vmand %vm582, %vm585
  %vm587 = vmand %vm583, %vm585
  %v588 = vsel %vm586, %v568, -3.4028235e+38
  %v589 = vsel %vm587, %v572, -3.4028235e+38
  %vm590 = vcmask 130048
  %v591 = vsel %vm590, %v588, -inf
  %592 = vmax.xlane.f32.xlu0 %v591
  %v593 = vpop.xlane.xlu0 %592
  %v594 = vsel %vm590, %v589, -inf
  %595 = vmax.xlane.f32.xlu0 %v594
  %v596 = vpop.xlane.xlu0 %595
  %v597 = vsub.f32 %v588, %v593
  %v598 = vsub.f32 %v589, %v596
  %v599 = vmul.f32 %v597, 1.442695
  %v600 = vpow.pop %v599
  %v601 = vmul.f32 %v598, 1.442695
  %v602 = vpow.pop %v601
  %v603 = vsel %vm590, %v600, 0.0
  %604 = vadd.xlane.f32.xlu0 %v603
  %v605 = vpop.xlane.xlu0 %604
  %v606 = vsel %vm590, %v602, 0.0
  %607 = vadd.xlane.f32.xlu0 %v606
  %v608 = vpop.xlane.xlu0 %607
  %v609 = vrcp.pop %v605
  %v610 = vmul.f32 %v605, %v609
  %v611 = vsub.f32 1.0, %v610
  %v612 = vmul.f32 %v609, %v611
  %v613 = vadd.f32 %v609, %v612
  %vm614 = vweird.f32 %v605
  %vm615 = vweird.f32 %v609
  %vm616 = vmor %vm614, %vm615
  %v617 = vsel %vm616, %v609, %v613
  %v618 = vand.u32 2147483647, %v605
  %vm619 = vcmp.eq.f32.partialorder %v618, 8.507059e+37
  %v620 = vand.u32 %v605, 2147483648
  %v621 = vor.u32 1.1754944e-38, %v620
  %v622 = vsel %vm619, %v621, %v617
  %v623 = vrcp.pop %v608
  %v624 = vmul.f32 %v608, %v623
  %v625 = vsub.f32 1.0, %v624
  %v626 = vmul.f32 %v623, %v625
  %v627 = vadd.f32 %v623, %v626
  %vm628 = vweird.f32 %v608
  %vm629 = vweird.f32 %v623
  %vm630 = vmor %vm628, %vm629
  %v631 = vsel %vm630, %v623, %v627
  %v632 = vand.u32 2147483647, %v608
  %vm633 = vcmp.eq.f32.partialorder %v632, 8.507059e+37
  %v634 = vand.u32 %v608, 2147483648
  %v635 = vor.u32 1.1754944e-38, %v634
  %v636 = vsel %vm633, %v635, %v631
  %v637 = vmul.f32 %v600, %v622
  %v638 = vmul.f32 %v602, %v636
  %v640 = vsel %vm590, %v637, 0
  %v643 = vsel %vm590, %v638, 0
  %645 = vmatpush.msra.mxu0 0.0
  %646 = vmatpush.msra.mxu0 0.0
  %647 = vmatpush.msra.mxu0 0.0
  %648 = vmatpush.msra.mxu0 0.0
  %649 = vmatpush.msra.mxu0 0.0
  %650 = vmatpush.msra.mxu0 0.0
  %651 = vmatpush.msra.mxu0 0.0
  %652 = vmatpush.msra.mxu0 0.0
  %653 = vmatpush.msra.mxu0 0.0
  %654 = vmatpush.msra.mxu0 0.0
  %655 = vmatpush.msra.mxu0 0.0
  %656 = vmatpush.msra.mxu0 0.0
  %657 = vmatpush.msra.mxu0 0.0
  %658 = vmatpush.msra.mxu0 0.0
  %v659 = vand.u32 %v205, 4294901760
  %660 = vmatpush.msra.mxu0 %v659
  %v661 = vand.u32 %v201, 4294901760
  %662 = vmatpush.msra.mxu0 %v661
  %v663 = vand.u32 %v640, 4294901760
  %v664 = vsub.f32 %v640, %v663
  %v665 = vand.u32 %v664, 4294901760
  %v666 = vsub.f32 %v664, %v665
  %v667 = vand.u32 %v666, 4294901760
  %668 = vmatmul.f32.gmra.mxu0 %v667
  %v669 = vpop.f32.mrf.mxu0
  %v670 = vadd.f32 0.0, %v669
  %v671 = vand.u32 %v643, 4294901760
  %v672 = vsub.f32 %v643, %v671
  %v673 = vand.u32 %v672, 4294901760
  %v674 = vsub.f32 %v672, %v673
  %v675 = vand.u32 %v674, 4294901760
  %676 = vmatmul.f32.gmra.mxu0 %v675
  %v677 = vpop.f32.mrf.mxu0
  %v678 = vadd.f32 0.0, %v677
  %679 = vdwg.mxu0
  %680 = vmatpush.msra.mxu0 0.0
  %681 = vmatpush.msra.mxu0 0.0
  %682 = vmatpush.msra.mxu0 0.0
  %683 = vmatpush.msra.mxu0 0.0
  %684 = vmatpush.msra.mxu0 0.0
  %685 = vmatpush.msra.mxu0 0.0
  %686 = vmatpush.msra.mxu0 0.0
  %687 = vmatpush.msra.mxu0 0.0
  %688 = vmatpush.msra.mxu0 0.0
  %689 = vmatpush.msra.mxu0 0.0
  %690 = vmatpush.msra.mxu0 0.0
  %691 = vmatpush.msra.mxu0 0.0
  %692 = vmatpush.msra.mxu0 0.0
  %693 = vmatpush.msra.mxu0 0.0
  %v694 = vand.u32 %v205, 4294901760
  %v695 = vsub.f32 %v205, %v694
  %v696 = vand.u32 %v695, 4294901760
  %v697 = vsub.f32 %v695, %v696
  %v698 = vand.u32 %v697, 4294901760
  %699 = vmatpush.msra.mxu0 %v698
  %v700 = vand.u32 %v201, 4294901760
  %v701 = vsub.f32 %v201, %v700
  %v702 = vand.u32 %v701, 4294901760
  %v703 = vsub.f32 %v701, %v702
  %v704 = vand.u32 %v703, 4294901760
  %705 = vmatpush.msra.mxu0 %v704
  %v706 = vand.u32 %v640, 4294901760
  %707 = vmatmul.f32.gmra.mxu0 %v706
  %v708 = vpop.f32.mrf.mxu0
  %v709 = vadd.f32 %v670, %v708
  %v710 = vand.u32 %v643, 4294901760
  %711 = vmatmul.f32.gmra.mxu0 %v710
  %v712 = vpop.f32.mrf.mxu0
  %v713 = vadd.f32 %v678, %v712
  %714 = vdwg.mxu0
  %715 = vmatpush.msra.mxu0 0.0
  %716 = vmatpush.msra.mxu0 0.0
  %717 = vmatpush.msra.mxu0 0.0
  %718 = vmatpush.msra.mxu0 0.0
  %719 = vmatpush.msra.mxu0 0.0
  %720 = vmatpush.msra.mxu0 0.0
  %721 = vmatpush.msra.mxu0 0.0
  %722 = vmatpush.msra.mxu0 0.0
  %723 = vmatpush.msra.mxu0 0.0
  %724 = vmatpush.msra.mxu0 0.0
  %725 = vmatpush.msra.mxu0 0.0
  %726 = vmatpush.msra.mxu0 0.0
  %727 = vmatpush.msra.mxu0 0.0
  %728 = vmatpush.msra.mxu0 0.0
  %v729 = vand.u32 %v205, 4294901760
  %v730 = vsub.f32 %v205, %v729
  %731 = vmatpush.msra.mxu0 %v730
  %v732 = vand.u32 %v201, 4294901760
  %v733 = vsub.f32 %v201, %v732
  %734 = vmatpush.msra.mxu0 %v733
  %v735 = vand.u32 %v640, 4294901760
  %v736 = vsub.f32 %v640, %v735
  %737 = vmatmul.f32.gmra.mxu0 %v736
  %v738 = vpop.f32.mrf.mxu0
  %v739 = vadd.f32 %v709, %v738
  %v740 = vand.u32 %v643, 4294901760
  %v741 = vsub.f32 %v643, %v740
  %742 = vmatmul.f32.gmra.mxu0 %v741
  %v743 = vpop.f32.mrf.mxu0
  %v744 = vadd.f32 %v713, %v743
  %745 = vdwg.mxu0
  %746 = vmatpush.msra.mxu0 0.0
  %747 = vmatpush.msra.mxu0 0.0
  %748 = vmatpush.msra.mxu0 0.0
  %749 = vmatpush.msra.mxu0 0.0
  %750 = vmatpush.msra.mxu0 0.0
  %751 = vmatpush.msra.mxu0 0.0
  %752 = vmatpush.msra.mxu0 0.0
  %753 = vmatpush.msra.mxu0 0.0
  %754 = vmatpush.msra.mxu0 0.0
  %755 = vmatpush.msra.mxu0 0.0
  %756 = vmatpush.msra.mxu0 0.0
  %757 = vmatpush.msra.mxu0 0.0
  %758 = vmatpush.msra.mxu0 0.0
  %759 = vmatpush.msra.mxu0 0.0
  %v760 = vand.u32 %v205, 4294901760
  %761 = vmatpush.msra.mxu0 %v760
  %v762 = vand.u32 %v201, 4294901760
  %763 = vmatpush.msra.mxu0 %v762
  %v764 = vand.u32 %v640, 4294901760
  %v765 = vsub.f32 %v640, %v764
  %v766 = vand.u32 %v765, 4294901760
  %767 = vmatmul.f32.gmra.mxu0 %v766
  %v768 = vpop.f32.mrf.mxu0
  %v769 = vadd.f32 %v739, %v768
  %v770 = vand.u32 %v643, 4294901760
  %v771 = vsub.f32 %v643, %v770
  %v772 = vand.u32 %v771, 4294901760
  %773 = vmatmul.f32.gmra.mxu0 %v772
  %v774 = vpop.f32.mrf.mxu0
  %v775 = vadd.f32 %v744, %v774
  %776 = vdwg.mxu0
  %777 = vmatpush.msra.mxu0 0.0
  %778 = vmatpush.msra.mxu0 0.0
  %779 = vmatpush.msra.mxu0 0.0
  %780 = vmatpush.msra.mxu0 0.0
  %781 = vmatpush.msra.mxu0 0.0
  %782 = vmatpush.msra.mxu0 0.0
  %783 = vmatpush.msra.mxu0 0.0
  %784 = vmatpush.msra.mxu0 0.0
  %785 = vmatpush.msra.mxu0 0.0
  %786 = vmatpush.msra.mxu0 0.0
  %787 = vmatpush.msra.mxu0 0.0
  %788 = vmatpush.msra.mxu0 0.0
  %789 = vmatpush.msra.mxu0 0.0
  %790 = vmatpush.msra.mxu0 0.0
  %v791 = vand.u32 %v205, 4294901760
  %v792 = vsub.f32 %v205, %v791
  %v793 = vand.u32 %v792, 4294901760
  %794 = vmatpush.msra.mxu0 %v793
  %v795 = vand.u32 %v201, 4294901760
  %v796 = vsub.f32 %v201, %v795
  %v797 = vand.u32 %v796, 4294901760
  %798 = vmatpush.msra.mxu0 %v797
  %v799 = vand.u32 %v640, 4294901760
  %800 = vmatmul.f32.gmra.mxu0 %v799
  %v801 = vpop.f32.mrf.mxu0
  %v802 = vadd.f32 %v769, %v801
  %v803 = vand.u32 %v643, 4294901760
  %804 = vmatmul.f32.gmra.mxu0 %v803
  %v805 = vpop.f32.mrf.mxu0
  %v806 = vadd.f32 %v775, %v805
  %807 = vdwg.mxu0
  %808 = vmatpush.msra.mxu0 0.0
  %809 = vmatpush.msra.mxu0 0.0
  %810 = vmatpush.msra.mxu0 0.0
  %811 = vmatpush.msra.mxu0 0.0
  %812 = vmatpush.msra.mxu0 0.0
  %813 = vmatpush.msra.mxu0 0.0
  %814 = vmatpush.msra.mxu0 0.0
  %815 = vmatpush.msra.mxu0 0.0
  %816 = vmatpush.msra.mxu0 0.0
  %817 = vmatpush.msra.mxu0 0.0
  %818 = vmatpush.msra.mxu0 0.0
  %819 = vmatpush.msra.mxu0 0.0
  %820 = vmatpush.msra.mxu0 0.0
  %821 = vmatpush.msra.mxu0 0.0
  %v822 = vand.u32 %v205, 4294901760
  %823 = vmatpush.msra.mxu0 %v822
  %v824 = vand.u32 %v201, 4294901760
  %825 = vmatpush.msra.mxu0 %v824
  %v826 = vand.u32 %v640, 4294901760
  %827 = vmatmul.f32.gmra.mxu0 %v826
  %v828 = vpop.f32.mrf.mxu0
  %v829 = vadd.f32 %v802, %v828
  %v830 = vand.u32 %v643, 4294901760
  %831 = vmatmul.f32.gmra.mxu0 %v830
  %v832 = vpop.f32.mrf.mxu0
  %v833 = vadd.f32 %v806, %v832
  %834 = vdwg.mxu0
  %835 = vst [vmem:[%s2] sm:$0xff] %v829
  %836 = vst [vmem:[%s2 + $0x8] sm:$0xff] %v833
  // Predicated region
  $region10: #{self_att_head.1} parent=0 // pred_check
    _
  $region11: #{self_att_head.1} parent=0 // pred_check_branch
    %838 = sbr.rel (0) target = $region13
  $region12: #{self_att_head.1} parent=0 // pred_region
    _
  $region13: #{self_att_head.1} parent=0 // pred_fallthru
    _
  // Predicated region
  $region14: #{self_att_head.1} parent=0 // pred_check
    _
  $region15: #{self_att_head.1} parent=0 // pred_check_branch
    %840 = sbr.rel (0) target = $region17
  $region16: #{self_att_head.1} parent=0 // pred_region
    _
  $region17: #{self_att_head.1} parent=0 // pred_fallthru
    _

</llo_original>
